<compile_context>
chip_gen: v5e
topology: v5e:2x2
jax: 0.10.0
libtpu: 0.0.40
codegen_flags: <defaults>
</compile_context>

<pallas_src>
import functools

import jax
import jax.numpy as jnp
import numpy as np
from jax import lax
from jax.experimental import pallas as pl
from jax.experimental.pallas import tpu as pltpu


# ------------------------------ helpers ------------------------------------ #
def _round_up(x, m):
    return (x + m - 1) // m * m


# ----------------------------- Pallas kernel ------------------------------- #
def _make_kernel(T_real, Tt, needs_mask, unroll):
    """Build the recurrence kernel (closes over static chunking parameters)."""

    def kernel(x_ref, wcomb_ref, bcomb_ref, wrec_ref, out_ref, hfin_ref, h_scr):
        gt = pl.program_id(1)  # time-chunk index (innermost, "arbitrary")

        # hidden_states is None -> zeros, at the start of every batch tile.
        @pl.when(gt == 0)
        def _():
            h_scr[...] = jnp.zeros_like(h_scr)

        Tt_, Bt_, I_ = x_ref.shape
        Hc_ = out_ref.shape[-1]

        # Per-chunk input projection: ONE big MXU matmul, staged straight into
        # the output block (reused as the xp buffer -> no extra VMEM, no HBM
        # round trip of the projected sequence).  Off the serial chain.
        xp = jnp.dot(x_ref[...].reshape(Tt_ * Bt_, I_), wcomb_ref[...],
                     preferred_element_type=jnp.float32) + bcomb_ref[...]
        out_ref[...] = xp.reshape(Tt_, Bt_, Hc_)

        wrec = wrec_ref[...]      # resident packed recurrent weight (Hc, Hc)
        h0 = h_scr[...]           # state enters vregs here (once per chunk)

        def step(t, h):
            # One packed MXU push per timestep: [h1|h2] @ [[wh1,wh2],[wc1,wc2]].
            pre = out_ref[t] + jnp.dot(h, wrec, preferred_element_type=jnp.float32)
            h_new = jnp.tanh(pre)                       # tanh -> EUP slot
            if needs_mask:                              # freeze state on padded steps
                h_new = jnp.where(gt * Tt_ + t < T_real, h_new, h)
            out_ref[t] = h_new                          # hidden_seq (packed [h1|h2])
            return h_new                                # carry stays in vregs

        h_fin = lax.fori_loop(0, Tt_, step, h0, unroll=unroll)

        h_scr[...] = h_fin        # persist across time chunks (one store / chunk)
        hfin_ref[...] = h_fin     # final [h1|h2]; cheap, written every chunk

    return kernel


# ------------------------------- wrapper ----------------------------------- #
@functools.partial(jax.jit, static_argnames=("single_buffer_weights",))
def recurrent_net_forward(x, params, single_buffer_weights=True):
    """x: (B, T, I) batch-first.  Returns (out (B,T,H), [h1 (1,B,H), h2 (1,B,H)])."""
    B, T, I = x.shape
    H = params["w_fc"].shape[1]
    f32 = jnp.float32

    # ---------------- tile geometry ----------------
    Hc = _round_up(2 * H, 128)          # both cells packed contiguously, lane-dense
    Bp0 = _round_up(B, 8)
    if Bp0 >= 16:                       # >=2 sublane-aligned batch tiles -> v7x megacore
        n_btiles = 2
        Bt = _round_up((Bp0 + 1) // 2, 8)
    else:
        n_btiles = 1
        Bt = Bp0
    Bp = Bt * n_btiles

    # Fixed-size time chunks + zero padding (no tiny-divisor fallback for awkward T).
    bytes_per_t = 4 * Bt * (I + Hc)                       # x-chunk + out-chunk per step
    tt_cap = max(8, (24 * 1024 * 1024) // (2 * bytes_per_t))
    Tt = int(min(128, tt_cap, _round_up(T, 8)))
    Tp = _round_up(T, Tt)
    n_chunks = Tp // Tt
    needs_mask = (Tp != T)
    unroll = True if Tt <= 64 else 8

    # ---------------- fold fc + cat([x,x]) into per-cell input weights ----------------
    w_fc = params["w_fc"].astype(f32)
    b_fc = params["b_fc"].astype(f32)

    def fold(wx, b):
        wfold = wx[:H] + wx[H:]                           # (H, H)
        return w_fc @ wfold, b_fc @ wfold + b             # (I, H), (1, H)

    wc1, bc1 = fold(params["wx1"].astype(f32), params["b1"].astype(f32))
    wc2, bc2 = fold(params["wx2"].astype(f32), params["b2"].astype(f32))

    # Pack both cells contiguously in columns [0:2H); zero-pad only up to Hc.
    wcomb = jnp.zeros((I, Hc), f32).at[:, :H].set(wc1).at[:, H:2 * H].set(wc2)
    bcomb = jnp.zeros((1, Hc), f32).at[:, :H].set(bc1).at[:, H:2 * H].set(bc2)

    # Packed recurrent weight: rows = [h1 | h2], cols = [pre1 | pre2].
    wrec = jnp.zeros((Hc, Hc), f32)
    wrec = wrec.at[:H, :H].set(params["wh1"].astype(f32))
    wrec = wrec.at[:H, H:2 * H].set(params["wh2"].astype(f32))
    wrec = wrec.at[H:2 * H, :H].set(params["wc1"].astype(f32))
    wrec = wrec.at[H:2 * H, H:2 * H].set(params["wc2"].astype(f32))

    # Time-major, zero-padded raw input (only I wide — projection happens in-kernel).
    x_tm = jnp.transpose(x.astype(f32), (1, 0, 2))        # (T, B, I)
    x_tm = jnp.pad(x_tm, ((0, Tp - T), (0, Bp - B), (0, 0)))

    # ---------------- VMEM budget ----------------
    vmem_needed = (
        2 * Tt * Bt * I * 4                 # x chunks (double buffered)
        + 2 * Tt * Bt * Hc * 4              # out chunks (double buffered)
        + 2 * (Hc * Hc + I * Hc + Hc) * 4   # resident weights (counted 2x, worst case)
        + 3 * Bt * Hc * 4                   # hfin (2x) + h_scr
    )
    vmem_limit = int(min(56 * 1024 * 1024, max(32 * 1024 * 1024, 2 * vmem_needed)))

    # Resident weight blocks: constant index map; single-buffer to avoid wasting a
    # full extra copy of the (Hc,Hc) weight in VMEM (matters on v7x's 64 MiB).
    if single_buffer_weights:
        def wspec(shape):
            return pl.BlockSpec(shape, lambda b, g: (0, 0),
                                pipeline_mode=pl.Buffered(1))
    else:
        def wspec(shape):
            return pl.BlockSpec(shape, lambda b, g: (0, 0))

    kernel = _make_kernel(T, Tt, needs_mask, unroll)

    out_seq_p, h_fin = pl.pallas_call(
        kernel,
        out_shape=(
            jax.ShapeDtypeStruct((Tp, Bp, Hc), f32),
            jax.ShapeDtypeStruct((Bp, Hc), f32),
        ),
        grid_spec=pltpu.PrefetchScalarGridSpec(
            num_scalar_prefetch=0,
            grid=(n_btiles, n_chunks),
            in_specs=[
                pl.BlockSpec((Tt, Bt, I), lambda b, g: (g, b, 0)),   # raw x chunk
                wspec((I, Hc)),                                      # wcomb  (resident)
                wspec((1, Hc)),                                      # bcomb  (resident)
                wspec((Hc, Hc)),                                     # wrec   (resident)
            ],
            out_specs=[
                pl.BlockSpec((Tt, Bt, Hc), lambda b, g: (g, b, 0)),  # packed hidden_seq
                pl.BlockSpec((Bt, Hc), lambda b, g: (b, 0)),         # final [h1|h2]
            ],
            scratch_shapes=[pltpu.VMEM((Bt, Hc), f32)],              # per-tile state
        ),
        compiler_params=pltpu.CompilerParams(
            dimension_semantics=("parallel", "arbitrary"),  # batch tiles ∥, time serial
            vmem_limit_bytes=vmem_limit,
        ),
    )(x_tm, wcomb, bcomb, wrec)

    # hidden_seq is cell-1's state (columns [0:H) of the packed output).
    out = jnp.transpose(out_seq_p[:T, :B, :H], (1, 0, 2))            # (B, T, H)
    h1_fin = h_fin[:B, :H][None]                                     # (1, B, H)
    h2_fin = h_fin[:B, H:2 * H][None]                                # (1, B, H)
    return out, [h1_fin, h2_fin]


# --------------------------- pure-JAX reference ----------------------------- #
def _reference(x, p):
    B, T, I = x.shape
    H = p["w_fc"].shape[1]
    h1 = jnp.zeros((B, H), jnp.float32)
    h2 = jnp.zeros((B, H), jnp.float32)
    outs = []
    for t in range(T):
        xf = x[:, t, :] @ p["w_fc"] + p["b_fc"]
        x1 = jnp.concatenate([xf, xf], axis=-1)
        n1 = jnp.tanh(x1 @ p["wx1"] + h1 @ p["wh1"] + h2 @ p["wc1"] + p["b1"])
        n2 = jnp.tanh(x1 @ p["wx2"] + h1 @ p["wh2"] + h2 @ p["wc2"] + p["b2"])
        h1, h2 = n1, n2
        outs.append(h1)
    return jnp.stack(outs, axis=1), [h1[None], h2[None]]


# ------------------------------- main -------------------------------------- #
def _make_params(key, input_size, hidden_size):
    H, I = hidden_size, input_size
    std_fc = 1.0 / np.sqrt(I)       # nn.Linear default init scale
    std_c = 1.0 / np.sqrt(H)        # init_weights: uniform(-1/sqrt(H), 1/sqrt(H))
    ks = jax.random.split(key, 10)
    u = lambda k, shape, s: jax.random.uniform(k, shape, jnp.float32, -s, s)
    return {
        "w_fc": u(ks[0], (I, H), std_fc), "b_fc": u(ks[1], (1, H), std_fc),
        "wx1": u(ks[2], (2 * H, H), std_c), "wh1": u(ks[3], (H, H), std_c),
        "wc1": u(ks[4], (H, H), std_c), "b1": u(ks[5], (1, H), std_c),
        "wx2": u(ks[6], (2 * H, H), std_c), "wh2": u(ks[7], (H, H), std_c),
        "wc2": u(ks[8], (H, H), std_c), "b2": u(ks[9], (1, H), std_c),
    }


if __name__ == "__main__":
    B, T, I, H = 4, 8, 16, 32  # batch, seq, input_size, hidden_size
    key = jax.random.PRNGKey(0)
    kx, kp = jax.random.split(key)
    x = jax.random.normal(kx, (B, T, I), jnp.float32)
    params = _make_params(kp, I, H)

    try:
        out, hidden = recurrent_net_forward(x, params, single_buffer_weights=True)
        out = jax.block_until_ready(out)
    except Exception:
        # Defensive fallback: if this jax build rejects pl.Buffered(1) on the
        # resident weight blocks, rerun with default (double) buffering.
        out, hidden = recurrent_net_forward(x, params, single_buffer_weights=False)
        out = jax.block_until_ready(out)
    hidden = [jax.block_until_ready(h) for h in hidden]

    ref_out, ref_hidden = _reference(x, params)
    assert out.shape == (B, T, H)
    assert hidden[0].shape == (1, B, H) and hidden[1].shape == (1, B, H)
    np.testing.assert_allclose(np.asarray(out), np.asarray(ref_out), atol=2e-4, rtol=2e-4)
    np.testing.assert_allclose(np.asarray(hidden[0]), np.asarray(ref_hidden[0]), atol=2e-4, rtol=2e-4)
    np.testing.assert_allclose(np.asarray(hidden[1]), np.asarray(ref_hidden[1]), atol=2e-4, rtol=2e-4)

    print("KERNEL_OK")
</pallas_src>

<mosaic_0001>
module attributes {stable_mosaic.version = 11 : i64} {
  func.func @kernel(%arg0: i32, %arg1: i32, %arg2: memref<8x8x16xf32, #tpu.memory_space<vmem>>, %arg3: memref<16x128xf32, #tpu.memory_space<vmem>>, %arg4: memref<1x128xf32, #tpu.memory_space<vmem>>, %arg5: memref<128x128xf32, #tpu.memory_space<vmem>>, %arg6: memref<8x8x128xf32, #tpu.memory_space<vmem>>, %arg7: memref<8x128xf32, #tpu.memory_space<vmem>>, %arg8: memref<8x128xf32, #tpu.memory_space<vmem>>) attributes {dimension_semantics = [#tpu.dimension_semantics<parallel>, #tpu.dimension_semantics<arbitrary>], iteration_bounds = array<i64: 1, 1>, scalar_prefetch = 0 : i64, scratch_operands = 1 : i64, tpu.core_type = #tpu.core_type<tc>, window_params = [{transform_indices = @transform_0, window_bounds = array<i64: 8, 8, 16>}, {pipeline_mode = #tpu.pipeline_mode<synchronous>, transform_indices = @transform_1, window_bounds = array<i64: 16, 128>}, {pipeline_mode = #tpu.pipeline_mode<synchronous>, transform_indices = @transform_2, window_bounds = array<i64: 1, 128>}, {pipeline_mode = #tpu.pipeline_mode<synchronous>, transform_indices = @transform_3, window_bounds = array<i64: 128, 128>}, {transform_indices = @transform_4, window_bounds = array<i64: 8, 8, 128>}, {transform_indices = @transform_5, window_bounds = array<i64: 8, 128>}]} {
    %c0_i32 = arith.constant 0 : i32
    %0 = arith.cmpi eq, %arg1, %c0_i32 : i32
    %1 = arith.extui %0 : i1 to i32
    %c0_i32_0 = arith.constant 0 : i32
    %2 = arith.cmpi ne, %1, %c0_i32_0 : i32
    scf.if %2 {
      %cst_59 = arith.constant 0.000000e+00 : f32
      %96 = vector.broadcast %cst_59 : f32 to vector<8x128xf32>
      %c0_60 = arith.constant 0 : index
      %c0_61 = arith.constant 0 : index
      %97 = vector.load %arg8[%c0_60, %c0_61] : memref<8x128xf32, #tpu.memory_space<vmem>>, vector<8x128xf32>
      tpu.vector_store %arg8[%c0_60, %c0_61], %96 {strides = array<i32>} : memref<8x128xf32, #tpu.memory_space<vmem>>, vector<8x128xf32>,
    } else {
    }
    %c0 = arith.constant 0 : index
    %c0_1 = arith.constant 0 : index
    %c0_2 = arith.constant 0 : index
    %3 = vector.load %arg2[%c0, %c0_1, %c0_2] : memref<8x8x16xf32, #tpu.memory_space<vmem>>, vector<8x8x16xf32>
    %4 = vector.shape_cast %3 : vector<8x8x16xf32> to vector<64x16xf32>
    %c0_3 = arith.constant 0 : index
    %c0_4 = arith.constant 0 : index
    %5 = vector.load %arg3[%c0_3, %c0_4] : memref<16x128xf32, #tpu.memory_space<vmem>>, vector<16x128xf32>
    %cst = arith.constant dense<0.000000e+00> : vector<64x128xf32>
    %6 = tpu.matmul %4, %5, %cst {dimension_numbers = #tpu.dot_dimension_numbers<[1], [0], [0], [1], [0, 0, 1, 1], [], []>} : vector<64x16xf32>, vector<16x128xf32>, vector<64x128xf32> -> vector<64x128xf32>
    %c0_5 = arith.constant 0 : index
    %c0_6 = arith.constant 0 : index
    %7 = vector.load %arg4[%c0_5, %c0_6] : memref<1x128xf32, #tpu.memory_space<vmem>>, vector<1x128xf32>
    %8 = vector.broadcast %7 : vector<1x128xf32> to vector<64x128xf32>
    %9 = arith.addf %6, %8 : vector<64x128xf32>
    %10 = vector.shape_cast %9 : vector<64x128xf32> to vector<8x8x128xf32>
    %c0_7 = arith.constant 0 : index
    %c0_8 = arith.constant 0 : index
    %c0_9 = arith.constant 0 : index
    %11 = vector.load %arg6[%c0_7, %c0_8, %c0_9] : memref<8x8x128xf32, #tpu.memory_space<vmem>>, vector<8x8x128xf32>
    tpu.vector_store %arg6[%c0_7, %c0_8, %c0_9], %10 {strides = array<i32>} : memref<8x8x128xf32, #tpu.memory_space<vmem>>, vector<8x8x128xf32>,
    %c0_10 = arith.constant 0 : index
    %c0_11 = arith.constant 0 : index
    %12 = vector.load %arg5[%c0_10, %c0_11] : memref<128x128xf32, #tpu.memory_space<vmem>>, vector<128x128xf32>
    %c0_12 = arith.constant 0 : index
    %c0_13 = arith.constant 0 : index
    %13 = vector.load %arg8[%c0_12, %c0_13] : memref<8x128xf32, #tpu.memory_space<vmem>>, vector<8x128xf32>
    %c0_i32_14 = arith.constant 0 : i32
    %14 = arith.index_cast %c0_i32_14 : i32 to index
    %c0_15 = arith.constant 0 : index
    %c0_16 = arith.constant 0 : index
    %15 = vector.load %arg6[%14, %c0_15, %c0_16] : memref<8x8x128xf32, #tpu.memory_space<vmem>>, vector<1x8x128xf32>
    %16 = vector.shape_cast %15 : vector<1x8x128xf32> to vector<8x128xf32>
    %cst_17 = arith.constant dense<0.000000e+00> : vector<8x128xf32>
    %17 = tpu.matmul %13, %12, %cst_17 {dimension_numbers = #tpu.dot_dimension_numbers<[1], [0], [0], [1], [0, 0, 1, 1], [], []>} : vector<8x128xf32>, vector<128x128xf32>, vector<8x128xf32> -> vector<8x128xf32>
    %18 = arith.addf %16, %17 : vector<8x128xf32>
    %19 = math.tanh %18 : vector<8x128xf32>
    %20 = arith.index_cast %c0_i32_14 : i32 to index
    %c0_18 = arith.constant 0 : index
    %c0_19 = arith.constant 0 : index
    %21 = vector.load %arg6[%20, %c0_18, %c0_19] : memref<8x8x128xf32, #tpu.memory_space<vmem>>, vector<1x8x128xf32>
    %22 = vector.shape_cast %21 : vector<1x8x128xf32> to vector<8x128xf32>
    %23 = vector.shape_cast %19 : vector<8x128xf32> to vector<1x8x128xf32>
    tpu.vector_store %arg6[%20, %c0_18, %c0_19], %23 {strides = array<i32>} : memref<8x8x128xf32, #tpu.memory_space<vmem>>, vector<1x8x128xf32>,
    %c1_i32 = arith.constant 1 : i32
    %24 = arith.index_cast %c1_i32 : i32 to index
    %c0_20 = arith.constant 0 : index
    %c0_21 = arith.constant 0 : index
    %25 = vector.load %arg6[%24, %c0_20, %c0_21] : memref<8x8x128xf32, #tpu.memory_space<vmem>>, vector<1x8x128xf32>
    %26 = vector.shape_cast %25 : vector<1x8x128xf32> to vector<8x128xf32>
    %cst_22 = arith.constant dense<0.000000e+00> : vector<8x128xf32>
    %27 = tpu.matmul %19, %12, %cst_22 {dimension_numbers = #tpu.dot_dimension_numbers<[1], [0], [0], [1], [0, 0, 1, 1], [], []>} : vector<8x128xf32>, vector<128x128xf32>, vector<8x128xf32> -> vector<8x128xf32>
    %28 = arith.addf %26, %27 : vector<8x128xf32>
    %29 = math.tanh %28 : vector<8x128xf32>
    %30 = arith.index_cast %c1_i32 : i32 to index
    %c0_23 = arith.constant 0 : index
    %c0_24 = arith.constant 0 : index
    %31 = vector.load %arg6[%30, %c0_23, %c0_24] : memref<8x8x128xf32, #tpu.memory_space<vmem>>, vector<1x8x128xf32>
    %32 = vector.shape_cast %31 : vector<1x8x128xf32> to vector<8x128xf32>
    %33 = vector.shape_cast %29 : vector<8x128xf32> to vector<1x8x128xf32>
    tpu.vector_store %arg6[%30, %c0_23, %c0_24], %33 {strides = array<i32>} : memref<8x8x128xf32, #tpu.memory_space<vmem>>, vector<1x8x128xf32>,
    %c2_i32 = arith.constant 2 : i32
    %34 = arith.index_cast %c2_i32 : i32 to index
    %c0_25 = arith.constant 0 : index
    %c0_26 = arith.constant 0 : index
    %35 = vector.load %arg6[%34, %c0_25, %c0_26] : memref<8x8x128xf32, #tpu.memory_space<vmem>>, vector<1x8x128xf32>
    %36 = vector.shape_cast %35 : vector<1x8x128xf32> to vector<8x128xf32>
    %cst_27 = arith.constant dense<0.000000e+00> : vector<8x128xf32>
    %37 = tpu.matmul %29, %12, %cst_27 {dimension_numbers = #tpu.dot_dimension_numbers<[1], [0], [0], [1], [0, 0, 1, 1], [], []>} : vector<8x128xf32>, vector<128x128xf32>, vector<8x128xf32> -> vector<8x128xf32>
    %38 = arith.addf %36, %37 : vector<8x128xf32>
    %39 = math.tanh %38 : vector<8x128xf32>
    %40 = arith.index_cast %c2_i32 : i32 to index
    %c0_28 = arith.constant 0 : index
    %c0_29 = arith.constant 0 : index
    %41 = vector.load %arg6[%40, %c0_28, %c0_29] : memref<8x8x128xf32, #tpu.memory_space<vmem>>, vector<1x8x128xf32>
    %42 = vector.shape_cast %41 : vector<1x8x128xf32> to vector<8x128xf32>
    %43 = vector.shape_cast %39 : vector<8x128xf32> to vector<1x8x128xf32>
    tpu.vector_store %arg6[%40, %c0_28, %c0_29], %43 {strides = array<i32>} : memref<8x8x128xf32, #tpu.memory_space<vmem>>, vector<1x8x128xf32>,
    %c3_i32 = arith.constant 3 : i32
    %44 = arith.index_cast %c3_i32 : i32 to index
    %c0_30 = arith.constant 0 : index
    %c0_31 = arith.constant 0 : index
    %45 = vector.load %arg6[%44, %c0_30, %c0_31] : memref<8x8x128xf32, #tpu.memory_space<vmem>>, vector<1x8x128xf32>
    %46 = vector.shape_cast %45 : vector<1x8x128xf32> to vector<8x128xf32>
    %cst_32 = arith.constant dense<0.000000e+00> : vector<8x128xf32>
    %47 = tpu.matmul %39, %12, %cst_32 {dimension_numbers = #tpu.dot_dimension_numbers<[1], [0], [0], [1], [0, 0, 1, 1], [], []>} : vector<8x128xf32>, vector<128x128xf32>, vector<8x128xf32> -> vector<8x128xf32>
    %48 = arith.addf %46, %47 : vector<8x128xf32>
    %49 = math.tanh %48 : vector<8x128xf32>
    %50 = arith.index_cast %c3_i32 : i32 to index
    %c0_33 = arith.constant 0 : index
    %c0_34 = arith.constant 0 : index
    %51 = vector.load %arg6[%50, %c0_33, %c0_34] : memref<8x8x128xf32, #tpu.memory_space<vmem>>, vector<1x8x128xf32>
    %52 = vector.shape_cast %51 : vector<1x8x128xf32> to vector<8x128xf32>
    %53 = vector.shape_cast %49 : vector<8x128xf32> to vector<1x8x128xf32>
    tpu.vector_store %arg6[%50, %c0_33, %c0_34], %53 {strides = array<i32>} : memref<8x8x128xf32, #tpu.memory_space<vmem>>, vector<1x8x128xf32>,
    %c4_i32 = arith.constant 4 : i32
    %54 = arith.index_cast %c4_i32 : i32 to index
    %c0_35 = arith.constant 0 : index
    %c0_36 = arith.constant 0 : index
    %55 = vector.load %arg6[%54, %c0_35, %c0_36] : memref<8x8x128xf32, #tpu.memory_space<vmem>>, vector<1x8x128xf32>
    %56 = vector.shape_cast %55 : vector<1x8x128xf32> to vector<8x128xf32>
    %cst_37 = arith.constant dense<0.000000e+00> : vector<8x128xf32>
    %57 = tpu.matmul %49, %12, %cst_37 {dimension_numbers = #tpu.dot_dimension_numbers<[1], [0], [0], [1], [0, 0, 1, 1], [], []>} : vector<8x128xf32>, vector<128x128xf32>, vector<8x128xf32> -> vector<8x128xf32>
    %58 = arith.addf %56, %57 : vector<8x128xf32>
    %59 = math.tanh %58 : vector<8x128xf32>
    %60 = arith.index_cast %c4_i32 : i32 to index
    %c0_38 = arith.constant 0 : index
    %c0_39 = arith.constant 0 : index
    %61 = vector.load %arg6[%60, %c0_38, %c0_39] : memref<8x8x128xf32, #tpu.memory_space<vmem>>, vector<1x8x128xf32>
    %62 = vector.shape_cast %61 : vector<1x8x128xf32> to vector<8x128xf32>
    %63 = vector.shape_cast %59 : vector<8x128xf32> to vector<1x8x128xf32>
    tpu.vector_store %arg6[%60, %c0_38, %c0_39], %63 {strides = array<i32>} : memref<8x8x128xf32, #tpu.memory_space<vmem>>, vector<1x8x128xf32>,
    %c5_i32 = arith.constant 5 : i32
    %64 = arith.index_cast %c5_i32 : i32 to index
    %c0_40 = arith.constant 0 : index
    %c0_41 = arith.constant 0 : index
    %65 = vector.load %arg6[%64, %c0_40, %c0_41] : memref<8x8x128xf32, #tpu.memory_space<vmem>>, vector<1x8x128xf32>
    %66 = vector.shape_cast %65 : vector<1x8x128xf32> to vector<8x128xf32>
    %cst_42 = arith.constant dense<0.000000e+00> : vector<8x128xf32>
    %67 = tpu.matmul %59, %12, %cst_42 {dimension_numbers = #tpu.dot_dimension_numbers<[1], [0], [0], [1], [0, 0, 1, 1], [], []>} : vector<8x128xf32>, vector<128x128xf32>, vector<8x128xf32> -> vector<8x128xf32>
    %68 = arith.addf %66, %67 : vector<8x128xf32>
    %69 = math.tanh %68 : vector<8x128xf32>
    %70 = arith.index_cast %c5_i32 : i32 to index
    %c0_43 = arith.constant 0 : index
    %c0_44 = arith.constant 0 : index
    %71 = vector.load %arg6[%70, %c0_43, %c0_44] : memref<8x8x128xf32, #tpu.memory_space<vmem>>, vector<1x8x128xf32>
    %72 = vector.shape_cast %71 : vector<1x8x128xf32> to vector<8x128xf32>
    %73 = vector.shape_cast %69 : vector<8x128xf32> to vector<1x8x128xf32>
    tpu.vector_store %arg6[%70, %c0_43, %c0_44], %73 {strides = array<i32>} : memref<8x8x128xf32, #tpu.memory_space<vmem>>, vector<1x8x128xf32>,
    %c6_i32 = arith.constant 6 : i32
    %74 = arith.index_cast %c6_i32 : i32 to index
    %c0_45 = arith.constant 0 : index
    %c0_46 = arith.constant 0 : index
    %75 = vector.load %arg6[%74, %c0_45, %c0_46] : memref<8x8x128xf32, #tpu.memory_space<vmem>>, vector<1x8x128xf32>
    %76 = vector.shape_cast %75 : vector<1x8x128xf32> to vector<8x128xf32>
    %cst_47 = arith.constant dense<0.000000e+00> : vector<8x128xf32>
    %77 = tpu.matmul %69, %12, %cst_47 {dimension_numbers = #tpu.dot_dimension_numbers<[1], [0], [0], [1], [0, 0, 1, 1], [], []>} : vector<8x128xf32>, vector<128x128xf32>, vector<8x128xf32> -> vector<8x128xf32>
    %78 = arith.addf %76, %77 : vector<8x128xf32>
    %79 = math.tanh %78 : vector<8x128xf32>
    %80 = arith.index_cast %c6_i32 : i32 to index
    %c0_48 = arith.constant 0 : index
    %c0_49 = arith.constant 0 : index
    %81 = vector.load %arg6[%80, %c0_48, %c0_49] : memref<8x8x128xf32, #tpu.memory_space<vmem>>, vector<1x8x128xf32>
    %82 = vector.shape_cast %81 : vector<1x8x128xf32> to vector<8x128xf32>
    %83 = vector.shape_cast %79 : vector<8x128xf32> to vector<1x8x128xf32>
    tpu.vector_store %arg6[%80, %c0_48, %c0_49], %83 {strides = array<i32>} : memref<8x8x128xf32, #tpu.memory_space<vmem>>, vector<1x8x128xf32>,
    %c7_i32 = arith.constant 7 : i32
    %84 = arith.index_cast %c7_i32 : i32 to index
    %c0_50 = arith.constant 0 : index
    %c0_51 = arith.constant 0 : index
    %85 = vector.load %arg6[%84, %c0_50, %c0_51] : memref<8x8x128xf32, #tpu.memory_space<vmem>>, vector<1x8x128xf32>
    %86 = vector.shape_cast %85 : vector<1x8x128xf32> to vector<8x128xf32>
    %cst_52 = arith.constant dense<0.000000e+00> : vector<8x128xf32>
    %87 = tpu.matmul %79, %12, %cst_52 {dimension_numbers = #tpu.dot_dimension_numbers<[1], [0], [0], [1], [0, 0, 1, 1], [], []>} : vector<8x128xf32>, vector<128x128xf32>, vector<8x128xf32> -> vector<8x128xf32>
    %88 = arith.addf %86, %87 : vector<8x128xf32>
    %89 = math.tanh %88 : vector<8x128xf32>
    %90 = arith.index_cast %c7_i32 : i32 to index
    %c0_53 = arith.constant 0 : index
    %c0_54 = arith.constant 0 : index
    %91 = vector.load %arg6[%90, %c0_53, %c0_54] : memref<8x8x128xf32, #tpu.memory_space<vmem>>, vector<1x8x128xf32>
    %92 = vector.shape_cast %91 : vector<1x8x128xf32> to vector<8x128xf32>
    %93 = vector.shape_cast %89 : vector<8x128xf32> to vector<1x8x128xf32>
    tpu.vector_store %arg6[%90, %c0_53, %c0_54], %93 {strides = array<i32>} : memref<8x8x128xf32, #tpu.memory_space<vmem>>, vector<1x8x128xf32>,
    %c8_i32 = arith.constant 8 : i32
    %c0_55 = arith.constant 0 : index
    %c0_56 = arith.constant 0 : index
    %94 = vector.load %arg8[%c0_55, %c0_56] : memref<8x128xf32, #tpu.memory_space<vmem>>, vector<8x128xf32>
    tpu.vector_store %arg8[%c0_55, %c0_56], %89 {strides = array<i32>} : memref<8x128xf32, #tpu.memory_space<vmem>>, vector<8x128xf32>,
    %c0_57 = arith.constant 0 : index
    %c0_58 = arith.constant 0 : index
    %95 = vector.load %arg7[%c0_57, %c0_58] : memref<8x128xf32, #tpu.memory_space<vmem>>, vector<8x128xf32>
    tpu.vector_store %arg7[%c0_57, %c0_58], %89 {strides = array<i32>} : memref<8x128xf32, #tpu.memory_space<vmem>>, vector<8x128xf32>,
    return
  }
  func.func @transform_0(%arg0: i32, %arg1: i32) -> (i32, i32, i32) {
    %c0_i32 = arith.constant 0 : i32
    %c0_i32_0 = arith.constant 0 : i32
    return %arg1, %arg0, %c0_i32 : i32, i32, i32
  }
  func.func @transform_1(%arg0: i32, %arg1: i32) -> (i32, i32) {
    %c0_i32 = arith.constant 0 : i32
    %c0_i32_0 = arith.constant 0 : i32
    %c0_i32_1 = arith.constant 0 : i32
    return %c0_i32, %c0_i32_0 : i32, i32
  }
  func.func @transform_2(%arg0: i32, %arg1: i32) -> (i32, i32) {
    %c0_i32 = arith.constant 0 : i32
    %c0_i32_0 = arith.constant 0 : i32
    %c0_i32_1 = arith.constant 0 : i32
    return %c0_i32, %c0_i32_0 : i32, i32
  }
  func.func @transform_3(%arg0: i32, %arg1: i32) -> (i32, i32) {
    %c0_i32 = arith.constant 0 : i32
    %c0_i32_0 = arith.constant 0 : i32
    %c0_i32_1 = arith.constant 0 : i32
    return %c0_i32, %c0_i32_0 : i32, i32
  }
  func.func @transform_4(%arg0: i32, %arg1: i32) -> (i32, i32, i32) {
    %c0_i32 = arith.constant 0 : i32
    %c0_i32_0 = arith.constant 0 : i32
    return %arg1, %arg0, %c0_i32 : i32, i32, i32
  }
  func.func @transform_5(%arg0: i32, %arg1: i32) -> (i32, i32) {
    %c0_i32 = arith.constant 0 : i32
    %c0_i32_0 = arith.constant 0 : i32
    return %arg0, %c0_i32 : i32, i32
  }
}

module attributes {stable_mosaic.version = 11 : i64} {
  func.func @kernel(%arg0: i32, %arg1: i32, %arg2: memref<8x8x16xf32, #tpu.memory_space<vmem>>, %arg3: memref<16x128xf32, #tpu.memory_space<vmem>>, %arg4: memref<1x128xf32, #tpu.memory_space<vmem>>, %arg5: memref<128x128xf32, #tpu.memory_space<vmem>>, %arg6: memref<8x8x128xf32, #tpu.memory_space<vmem>>, %arg7: memref<8x128xf32, #tpu.memory_space<vmem>>, %arg8: memref<8x128xf32, #tpu.memory_space<vmem>>) attributes {dimension_semantics = [#tpu.dimension_semantics<parallel>, #tpu.dimension_semantics<arbitrary>], iteration_bounds = array<i64: 1, 1>, scalar_prefetch = 0 : i64, scratch_operands = 1 : i64, tpu.core_type = #tpu.core_type<tc>, window_params = [{transform_indices = @transform_0, window_bounds = array<i64: 8, 8, 16>}, {pipeline_mode = #tpu.pipeline_mode<synchronous>, transform_indices = @transform_1, window_bounds = array<i64: 16, 128>}, {pipeline_mode = #tpu.pipeline_mode<synchronous>, transform_indices = @transform_2, window_bounds = array<i64: 1, 128>}, {pipeline_mode = #tpu.pipeline_mode<synchronous>, transform_indices = @transform_3, window_bounds = array<i64: 128, 128>}, {transform_indices = @transform_4, window_bounds = array<i64: 8, 8, 128>}, {transform_indices = @transform_5, window_bounds = array<i64: 8, 128>}]} {
    %c0_i32 = arith.constant 0 : i32
    %0 = arith.cmpi eq, %arg1, %c0_i32 : i32
    %1 = arith.extui %0 : i1 to i32
    %c0_i32_0 = arith.constant 0 : i32
    %2 = arith.cmpi ne, %1, %c0_i32_0 : i32
    scf.if %2 {
      %cst_59 = arith.constant 0.000000e+00 : f32
      %96 = vector.broadcast %cst_59 : f32 to vector<8x128xf32>
      %c0_60 = arith.constant 0 : index
      %c0_61 = arith.constant 0 : index
      %97 = vector.load %arg8[%c0_60, %c0_61] : memref<8x128xf32, #tpu.memory_space<vmem>>, vector<8x128xf32>
      tpu.vector_store %arg8[%c0_60, %c0_61], %96 {strides = array<i32>} : memref<8x128xf32, #tpu.memory_space<vmem>>, vector<8x128xf32>,
    } else {
    }
    %c0 = arith.constant 0 : index
    %c0_1 = arith.constant 0 : index
    %c0_2 = arith.constant 0 : index
    %3 = vector.load %arg2[%c0, %c0_1, %c0_2] : memref<8x8x16xf32, #tpu.memory_space<vmem>>, vector<8x8x16xf32>
    %4 = vector.shape_cast %3 : vector<8x8x16xf32> to vector<64x16xf32>
    %c0_3 = arith.constant 0 : index
    %c0_4 = arith.constant 0 : index
    %5 = vector.load %arg3[%c0_3, %c0_4] : memref<16x128xf32, #tpu.memory_space<vmem>>, vector<16x128xf32>
    %cst = arith.constant dense<0.000000e+00> : vector<64x128xf32>
    %6 = tpu.matmul %4, %5, %cst {dimension_numbers = #tpu.dot_dimension_numbers<[1], [0], [0], [1], [0, 0, 1, 1], [], []>} : vector<64x16xf32>, vector<16x128xf32>, vector<64x128xf32> -> vector<64x128xf32>
    %c0_5 = arith.constant 0 : index
    %c0_6 = arith.constant 0 : index
    %7 = vector.load %arg4[%c0_5, %c0_6] : memref<1x128xf32, #tpu.memory_space<vmem>>, vector<1x128xf32>
    %8 = vector.broadcast %7 : vector<1x128xf32> to vector<64x128xf32>
    %9 = arith.addf %6, %8 : vector<64x128xf32>
    %10 = vector.shape_cast %9 : vector<64x128xf32> to vector<8x8x128xf32>
    %c0_7 = arith.constant 0 : index
    %c0_8 = arith.constant 0 : index
    %c0_9 = arith.constant 0 : index
    %11 = vector.load %arg6[%c0_7, %c0_8, %c0_9] : memref<8x8x128xf32, #tpu.memory_space<vmem>>, vector<8x8x128xf32>
    tpu.vector_store %arg6[%c0_7, %c0_8, %c0_9], %10 {strides = array<i32>} : memref<8x8x128xf32, #tpu.memory_space<vmem>>, vector<8x8x128xf32>,
    %c0_10 = arith.constant 0 : index
    %c0_11 = arith.constant 0 : index
    %12 = vector.load %arg5[%c0_10, %c0_11] : memref<128x128xf32, #tpu.memory_space<vmem>>, vector<128x128xf32>
    %c0_12 = arith.constant 0 : index
    %c0_13 = arith.constant 0 : index
    %13 = vector.load %arg8[%c0_12, %c0_13] : memref<8x128xf32, #tpu.memory_space<vmem>>, vector<8x128xf32>
    %c0_i32_14 = arith.constant 0 : i32
    %14 = arith.index_cast %c0_i32_14 : i32 to index
    %c0_15 = arith.constant 0 : index
    %c0_16 = arith.constant 0 : index
    %15 = vector.load %arg6[%14, %c0_15, %c0_16] : memref<8x8x128xf32, #tpu.memory_space<vmem>>, vector<1x8x128xf32>
    %16 = vector.shape_cast %15 : vector<1x8x128xf32> to vector<8x128xf32>
    %cst_17 = arith.constant dense<0.000000e+00> : vector<8x128xf32>
    %17 = tpu.matmul %13, %12, %cst_17 {dimension_numbers = #tpu.dot_dimension_numbers<[1], [0], [0], [1], [0, 0, 1, 1], [], []>} : vector<8x128xf32>, vector<128x128xf32>, vector<8x128xf32> -> vector<8x128xf32>
    %18 = arith.addf %16, %17 : vector<8x128xf32>
    %19 = math.tanh %18 : vector<8x128xf32>
    %20 = arith.index_cast %c0_i32_14 : i32 to index
    %c0_18 = arith.constant 0 : index
    %c0_19 = arith.constant 0 : index
    %21 = vector.load %arg6[%20, %c0_18, %c0_19] : memref<8x8x128xf32, #tpu.memory_space<vmem>>, vector<1x8x128xf32>
    %22 = vector.shape_cast %21 : vector<1x8x128xf32> to vector<8x128xf32>
    %23 = vector.shape_cast %19 : vector<8x128xf32> to vector<1x8x128xf32>
    tpu.vector_store %arg6[%20, %c0_18, %c0_19], %23 {strides = array<i32>} : memref<8x8x128xf32, #tpu.memory_space<vmem>>, vector<1x8x128xf32>,
    %c1_i32 = arith.constant 1 : i32
    %24 = arith.index_cast %c1_i32 : i32 to index
    %c0_20 = arith.constant 0 : index
    %c0_21 = arith.constant 0 : index
    %25 = vector.load %arg6[%24, %c0_20, %c0_21] : memref<8x8x128xf32, #tpu.memory_space<vmem>>, vector<1x8x128xf32>
    %26 = vector.shape_cast %25 : vector<1x8x128xf32> to vector<8x128xf32>
    %cst_22 = arith.constant dense<0.000000e+00> : vector<8x128xf32>
    %27 = tpu.matmul %19, %12, %cst_22 {dimension_numbers = #tpu.dot_dimension_numbers<[1], [0], [0], [1], [0, 0, 1, 1], [], []>} : vector<8x128xf32>, vector<128x128xf32>, vector<8x128xf32> -> vector<8x128xf32>
    %28 = arith.addf %26, %27 : vector<8x128xf32>
    %29 = math.tanh %28 : vector<8x128xf32>
    %30 = arith.index_cast %c1_i32 : i32 to index
    %c0_23 = arith.constant 0 : index
    %c0_24 = arith.constant 0 : index
    %31 = vector.load %arg6[%30, %c0_23, %c0_24] : memref<8x8x128xf32, #tpu.memory_space<vmem>>, vector<1x8x128xf32>
    %32 = vector.shape_cast %31 : vector<1x8x128xf32> to vector<8x128xf32>
    %33 = vector.shape_cast %29 : vector<8x128xf32> to vector<1x8x128xf32>
    tpu.vector_store %arg6[%30, %c0_23, %c0_24], %33 {strides = array<i32>} : memref<8x8x128xf32, #tpu.memory_space<vmem>>, vector<1x8x128xf32>,
    %c2_i32 = arith.constant 2 : i32
    %34 = arith.index_cast %c2_i32 : i32 to index
    %c0_25 = arith.constant 0 : index
    %c0_26 = arith.constant 0 : index
    %35 = vector.load %arg6[%34, %c0_25, %c0_26] : memref<8x8x128xf32, #tpu.memory_space<vmem>>, vector<1x8x128xf32>
    %36 = vector.shape_cast %35 : vector<1x8x128xf32> to vector<8x128xf32>
    %cst_27 = arith.constant dense<0.000000e+00> : vector<8x128xf32>
    %37 = tpu.matmul %29, %12, %cst_27 {dimension_numbers = #tpu.dot_dimension_numbers<[1], [0], [0], [1], [0, 0, 1, 1], [], []>} : vector<8x128xf32>, vector<128x128xf32>, vector<8x128xf32> -> vector<8x128xf32>
    %38 = arith.addf %36, %37 : vector<8x128xf32>
    %39 = math.tanh %38 : vector<8x128xf32>
    %40 = arith.index_cast %c2_i32 : i32 to index
    %c0_28 = arith.constant 0 : index
    %c0_29 = arith.constant 0 : index
    %41 = vector.load %arg6[%40, %c0_28, %c0_29] : memref<8x8x128xf32, #tpu.memory_space<vmem>>, vector<1x8x128xf32>
    %42 = vector.shape_cast %41 : vector<1x8x128xf32> to vector<8x128xf32>
    %43 = vector.shape_cast %39 : vector<8x128xf32> to vector<1x8x128xf32>
    tpu.vector_store %arg6[%40, %c0_28, %c0_29], %43 {strides = array<i32>} : memref<8x8x128xf32, #tpu.memory_space<vmem>>, vector<1x8x128xf32>,
    %c3_i32 = arith.constant 3 : i32
    %44 = arith.index_cast %c3_i32 : i32 to index
    %c0_30 = arith.constant 0 : index
    %c0_31 = arith.constant 0 : index
    %45 = vector.load %arg6[%44, %c0_30, %c0_31] : memref<8x8x128xf32, #tpu.memory_space<vmem>>, vector<1x8x128xf32>
    %46 = vector.shape_cast %45 : vector<1x8x128xf32> to vector<8x128xf32>
    %cst_32 = arith.constant dense<0.000000e+00> : vector<8x128xf32>
    %47 = tpu.matmul %39, %12, %cst_32 {dimension_numbers = #tpu.dot_dimension_numbers<[1], [0], [0], [1], [0, 0, 1, 1], [], []>} : vector<8x128xf32>, vector<128x128xf32>, vector<8x128xf32> -> vector<8x128xf32>
    %48 = arith.addf %46, %47 : vector<8x128xf32>
    %49 = math.tanh %48 : vector<8x128xf32>
    %50 = arith.index_cast %c3_i32 : i32 to index
    %c0_33 = arith.constant 0 : index
    %c0_34 = arith.constant 0 : index
    %51 = vector.load %arg6[%50, %c0_33, %c0_34] : memref<8x8x128xf32, #tpu.memory_space<vmem>>, vector<1x8x128xf32>
    %52 = vector.shape_cast %51 : vector<1x8x128xf32> to vector<8x128xf32>
    %53 = vector.shape_cast %49 : vector<8x128xf32> to vector<1x8x128xf32>
    tpu.vector_store %arg6[%50, %c0_33, %c0_34], %53 {strides = array<i32>} : memref<8x8x128xf32, #tpu.memory_space<vmem>>, vector<1x8x128xf32>,
    %c4_i32 = arith.constant 4 : i32
    %54 = arith.index_cast %c4_i32 : i32 to index
    %c0_35 = arith.constant 0 : index
    %c0_36 = arith.constant 0 : index
    %55 = vector.load %arg6[%54, %c0_35, %c0_36] : memref<8x8x128xf32, #tpu.memory_space<vmem>>, vector<1x8x128xf32>
    %56 = vector.shape_cast %55 : vector<1x8x128xf32> to vector<8x128xf32>
    %cst_37 = arith.constant dense<0.000000e+00> : vector<8x128xf32>
    %57 = tpu.matmul %49, %12, %cst_37 {dimension_numbers = #tpu.dot_dimension_numbers<[1], [0], [0], [1], [0, 0, 1, 1], [], []>} : vector<8x128xf32>, vector<128x128xf32>, vector<8x128xf32> -> vector<8x128xf32>
    %58 = arith.addf %56, %57 : vector<8x128xf32>
    %59 = math.tanh %58 : vector<8x128xf32>
    %60 = arith.index_cast %c4_i32 : i32 to index
    %c0_38 = arith.constant 0 : index
    %c0_39 = arith.constant 0 : index
    %61 = vector.load %arg6[%60, %c0_38, %c0_39] : memref<8x8x128xf32, #tpu.memory_space<vmem>>, vector<1x8x128xf32>
    %62 = vector.shape_cast %61 : vector<1x8x128xf32> to vector<8x128xf32>
    %63 = vector.shape_cast %59 : vector<8x128xf32> to vector<1x8x128xf32>
    tpu.vector_store %arg6[%60, %c0_38, %c0_39], %63 {strides = array<i32>} : memref<8x8x128xf32, #tpu.memory_space<vmem>>, vector<1x8x128xf32>,
    %c5_i32 = arith.constant 5 : i32
    %64 = arith.index_cast %c5_i32 : i32 to index
    %c0_40 = arith.constant 0 : index
    %c0_41 = arith.constant 0 : index
    %65 = vector.load %arg6[%64, %c0_40, %c0_41] : memref<8x8x128xf32, #tpu.memory_space<vmem>>, vector<1x8x128xf32>
    %66 = vector.shape_cast %65 : vector<1x8x128xf32> to vector<8x128xf32>
    %cst_42 = arith.constant dense<0.000000e+00> : vector<8x128xf32>
    %67 = tpu.matmul %59, %12, %cst_42 {dimension_numbers = #tpu.dot_dimension_numbers<[1], [0], [0], [1], [0, 0, 1, 1], [], []>} : vector<8x128xf32>, vector<128x128xf32>, vector<8x128xf32> -> vector<8x128xf32>
    %68 = arith.addf %66, %67 : vector<8x128xf32>
    %69 = math.tanh %68 : vector<8x128xf32>
    %70 = arith.index_cast %c5_i32 : i32 to index
    %c0_43 = arith.constant 0 : index
    %c0_44 = arith.constant 0 : index
    %71 = vector.load %arg6[%70, %c0_43, %c0_44] : memref<8x8x128xf32, #tpu.memory_space<vmem>>, vector<1x8x128xf32>
    %72 = vector.shape_cast %71 : vector<1x8x128xf32> to vector<8x128xf32>
    %73 = vector.shape_cast %69 : vector<8x128xf32> to vector<1x8x128xf32>
    tpu.vector_store %arg6[%70, %c0_43, %c0_44], %73 {strides = array<i32>} : memref<8x8x128xf32, #tpu.memory_space<vmem>>, vector<1x8x128xf32>,
    %c6_i32 = arith.constant 6 : i32
    %74 = arith.index_cast %c6_i32 : i32 to index
    %c0_45 = arith.constant 0 : index
    %c0_46 = arith.constant 0 : index
    %75 = vector.load %arg6[%74, %c0_45, %c0_46] : memref<8x8x128xf32, #tpu.memory_space<vmem>>, vector<1x8x128xf32>
    %76 = vector.shape_cast %75 : vector<1x8x128xf32> to vector<8x128xf32>
    %cst_47 = arith.constant dense<0.000000e+00> : vector<8x128xf32>
    %77 = tpu.matmul %69, %12, %cst_47 {dimension_numbers = #tpu.dot_dimension_numbers<[1], [0], [0], [1], [0, 0, 1, 1], [], []>} : vector<8x128xf32>, vector<128x128xf32>, vector<8x128xf32> -> vector<8x128xf32>
    %78 = arith.addf %76, %77 : vector<8x128xf32>
    %79 = math.tanh %78 : vector<8x128xf32>
    %80 = arith.index_cast %c6_i32 : i32 to index
    %c0_48 = arith.constant 0 : index
    %c0_49 = arith.constant 0 : index
    %81 = vector.load %arg6[%80, %c0_48, %c0_49] : memref<8x8x128xf32, #tpu.memory_space<vmem>>, vector<1x8x128xf32>
    %82 = vector.shape_cast %81 : vector<1x8x128xf32> to vector<8x128xf32>
    %83 = vector.shape_cast %79 : vector<8x128xf32> to vector<1x8x128xf32>
    tpu.vector_store %arg6[%80, %c0_48, %c0_49], %83 {strides = array<i32>} : memref<8x8x128xf32, #tpu.memory_space<vmem>>, vector<1x8x128xf32>,
    %c7_i32 = arith.constant 7 : i32
    %84 = arith.index_cast %c7_i32 : i32 to index
    %c0_50 = arith.constant 0 : index
    %c0_51 = arith.constant 0 : index
    %85 = vector.load %arg6[%84, %c0_50, %c0_51] : memref<8x8x128xf32, #tpu.memory_space<vmem>>, vector<1x8x128xf32>
    %86 = vector.shape_cast %85 : vector<1x8x128xf32> to vector<8x128xf32>
    %cst_52 = arith.constant dense<0.000000e+00> : vector<8x128xf32>
    %87 = tpu.matmul %79, %12, %cst_52 {dimension_numbers = #tpu.dot_dimension_numbers<[1], [0], [0], [1], [0, 0, 1, 1], [], []>} : vector<8x128xf32>, vector<128x128xf32>, vector<8x128xf32> -> vector<8x128xf32>
    %88 = arith.addf %86, %87 : vector<8x128xf32>
    %89 = math.tanh %88 : vector<8x128xf32>
    %90 = arith.index_cast %c7_i32 : i32 to index
    %c0_53 = arith.constant 0 : index
    %c0_54 = arith.constant 0 : index
    %91 = vector.load %arg6[%90, %c0_53, %c0_54] : memref<8x8x128xf32, #tpu.memory_space<vmem>>, vector<1x8x128xf32>
    %92 = vector.shape_cast %91 : vector<1x8x128xf32> to vector<8x128xf32>
    %93 = vector.shape_cast %89 : vector<8x128xf32> to vector<1x8x128xf32>
    tpu.vector_store %arg6[%90, %c0_53, %c0_54], %93 {strides = array<i32>} : memref<8x8x128xf32, #tpu.memory_space<vmem>>, vector<1x8x128xf32>,
    %c8_i32 = arith.constant 8 : i32
    %c0_55 = arith.constant 0 : index
    %c0_56 = arith.constant 0 : index
    %94 = vector.load %arg8[%c0_55, %c0_56] : memref<8x128xf32, #tpu.memory_space<vmem>>, vector<8x128xf32>
    tpu.vector_store %arg8[%c0_55, %c0_56], %89 {strides = array<i32>} : memref<8x128xf32, #tpu.memory_space<vmem>>, vector<8x128xf32>,
    %c0_57 = arith.constant 0 : index
    %c0_58 = arith.constant 0 : index
    %95 = vector.load %arg7[%c0_57, %c0_58] : memref<8x128xf32, #tpu.memory_space<vmem>>, vector<8x128xf32>
    tpu.vector_store %arg7[%c0_57, %c0_58], %89 {strides = array<i32>} : memref<8x128xf32, #tpu.memory_space<vmem>>, vector<8x128xf32>,
    return
  }
  func.func @transform_0(%arg0: i32, %arg1: i32) -> (i32, i32, i32) {
    %c0_i32 = arith.constant 0 : i32
    %c0_i32_0 = arith.constant 0 : i32
    return %arg1, %arg0, %c0_i32 : i32, i32, i32
  }
  func.func @transform_1(%arg0: i32, %arg1: i32) -> (i32, i32) {
    %c0_i32 = arith.constant 0 : i32
    %c0_i32_0 = arith.constant 0 : i32
    %c0_i32_1 = arith.constant 0 : i32
    return %c0_i32, %c0_i32_0 : i32, i32
  }
  func.func @transform_2(%arg0: i32, %arg1: i32) -> (i32, i32) {
    %c0_i32 = arith.constant 0 : i32
    %c0_i32_0 = arith.constant 0 : i32
    %c0_i32_1 = arith.constant 0 : i32
    return %c0_i32, %c0_i32_0 : i32, i32
  }
  func.func @transform_3(%arg0: i32, %arg1: i32) -> (i32, i32) {
    %c0_i32 = arith.constant 0 : i32
    %c0_i32_0 = arith.constant 0 : i32
    %c0_i32_1 = arith.constant 0 : i32
    return %c0_i32, %c0_i32_0 : i32, i32
  }
  func.func @transform_4(%arg0: i32, %arg1: i32) -> (i32, i32, i32) {
    %c0_i32 = arith.constant 0 : i32
    %c0_i32_0 = arith.constant 0 : i32
    return %arg1, %arg0, %c0_i32 : i32, i32, i32
  }
  func.func @transform_5(%arg0: i32, %arg1: i32) -> (i32, i32) {
    %c0_i32 = arith.constant 0 : i32
    %c0_i32_0 = arith.constant 0 : i32
    return %arg0, %c0_i32 : i32, i32
  }
}

</mosaic_0001>

<llo_original>
// kernel: recurrent_net_forward.1
$region0: #{recurrent_net_forward.1}
  #allocation0 [shape = 'u32[]', space=smem, size = 0x4, offset = 0x4, fixed_abs, tag = 'smem constant byte address 0x4 - core index']
  #allocation1 [shape = 'u32[72,128]{1,0:T(1,128)}', space=vmem, size = 0x9000, scoped, tag = 'internal scratch']
  #allocation2 [shape = 'f32[8,128]{1,0:T(8,128)}', space=vmem, size = 0x1000, scoped, tag = 'scratch operand']
  %s0 = inlined_call_operand.vmem [shape: f32[8,8,16], index: 0, kind: input, shape index: {}]
  %s1 = inlined_call_operand.vmem [shape: f32[16,128], index: 1, kind: input, shape index: {}]
  %s2 = inlined_call_operand.vmem [shape: f32[1,128], index: 2, kind: input, shape index: {}]
  %s3 = inlined_call_operand.vmem [shape: f32[128,128], index: 3, kind: input, shape index: {}]
  %s4 = inlined_call_operand.vmem [shape: f32[8,8,128], index: 4, kind: output, shape index: {0}]
  %s5 = inlined_call_operand.vmem [shape: f32[8,128], index: 5, kind: output, shape index: {1}]
  %6 = xla_tuple %s4, %s5
  %s7 = sld [smem:[#allocation0]]
  $region38: #{recurrent_net_forward.1} parent=0
    _
  %s9 = ssub.s32 1, %s7
  %s10 = scalar_select 0, %s9, %s7
  // Predicated region
  $region2: #{recurrent_net_forward.1} parent=0 // pred_check
    _
  $region3: #{recurrent_net_forward.1} parent=0 // pred_check_branch
    %12 = sbr.rel (0) target = $region5
  $region4: #{recurrent_net_forward.1} parent=0 // pred_region
    _
  $region5: #{recurrent_net_forward.1} parent=0 // pred_fallthru
    _
  // Predicated region
  $region6: #{recurrent_net_forward.1} parent=0 // pred_check
    _
  $region7: #{recurrent_net_forward.1} parent=0 // pred_check_branch
    %14 = sbr.rel (0) target = $region9
  $region8: #{recurrent_net_forward.1} parent=0 // pred_region
    _
  $region9: #{recurrent_net_forward.1} parent=0 // pred_fallthru
    _
  // Predicated region
  $region10: #{recurrent_net_forward.1} parent=0 // pred_check
    _
  $region11: #{recurrent_net_forward.1} parent=0 // pred_check_branch
    %16 = sbr.rel (0) target = $region13
  $region12: #{recurrent_net_forward.1} parent=0 // pred_region
    _
  $region13: #{recurrent_net_forward.1} parent=0 // pred_fallthru
    _
  // Predicated region
  $region14: #{recurrent_net_forward.1} parent=0 // pred_check
    _
  $region15: #{recurrent_net_forward.1} parent=0 // pred_check_branch
    %18 = sbr.rel (0) target = $region17
  $region16: #{recurrent_net_forward.1} parent=0 // pred_region
    _
  $region17: #{recurrent_net_forward.1} parent=0 // pred_fallthru
    _
  %p19 = scmp.eq.s32.totalorder 0, 0
  // Predicated region
  $region18: #{recurrent_net_forward.1} parent=0 // pred_check
    %p20 = pneg %p19
  $region19: #{recurrent_net_forward.1} parent=0 // pred_check_branch
    %22 = sbr.rel (%p20) target = $region21
  $region20: #{recurrent_net_forward.1} parent=0 // pred_region
    %23 = vst [vmem:[#allocation2] sm:$0xff] 0.0
  $region21: #{recurrent_net_forward.1} parent=0 // pred_fallthru
    _
  %v24 = vld [vmem:[%s0] sm:$0xff]
  %v25 = vld [vmem:[%s0 + $0x8] sm:$0xff]
  %v26 = vld [vmem:[%s0 + $0x10] sm:$0xff]
  %v27 = vld [vmem:[%s0 + $0x18] sm:$0xff]
  %v28 = vld [vmem:[%s0 + $0x20] sm:$0xff]
  %v29 = vld [vmem:[%s0 + $0x28] sm:$0xff]
  %v30 = vld [vmem:[%s0 + $0x30] sm:$0xff]
  %v31 = vld [vmem:[%s0 + $0x38] sm:$0xff]
  %v32 = vld [vmem:[%s1] sm:$0xff]
  %v33 = vld [vmem:[%s1 + $0x8] sm:$0xff]
  %v34 = vld [vmem:[%s2] sm:$0x1]
  %v36 = vperm.slane %v34, 0
  %vm38 = vcmask 130048
  %v40 = vsel %vm38, %v24, 0
  %v43 = vsel %vm38, %v25, 0
  %v46 = vsel %vm38, %v26, 0
  %v49 = vsel %vm38, %v27, 0
  %v52 = vsel %vm38, %v28, 0
  %v55 = vsel %vm38, %v29, 0
  %v58 = vsel %vm38, %v30, 0
  %v61 = vsel %vm38, %v31, 0
  %63 = vmatpush.msra.mxu0 0.0
  %64 = vmatpush.msra.mxu0 0.0
  %65 = vmatpush.msra.mxu0 0.0
  %66 = vmatpush.msra.mxu0 0.0
  %67 = vmatpush.msra.mxu0 0.0
  %68 = vmatpush.msra.mxu0 0.0
  %69 = vmatpush.msra.mxu0 0.0
  %70 = vmatpush.msra.mxu0 0.0
  %71 = vmatpush.msra.mxu0 0.0
  %72 = vmatpush.msra.mxu0 0.0
  %73 = vmatpush.msra.mxu0 0.0
  %74 = vmatpush.msra.mxu0 0.0
  %75 = vmatpush.msra.mxu0 0.0
  %76 = vmatpush.msra.mxu0 0.0
  %77 = vmatpush.msra.mxu0 %v33
  %78 = vmatpush.msra.mxu0 %v32
  %79 = vmatmul.f32.gmra.mxu0 %v40
  %v80 = vpop.f32.mrf.mxu0
  %v81 = vadd.f32 %v36, %v80
  %82 = vmatmul.f32.gmra.mxu0 %v43
  %v83 = vpop.f32.mrf.mxu0
  %v84 = vadd.f32 %v36, %v83
  %85 = vmatmul.f32.gmra.mxu0 %v46
  %v86 = vpop.f32.mrf.mxu0
  %v87 = vadd.f32 %v36, %v86
  %88 = vmatmul.f32.gmra.mxu0 %v49
  %v89 = vpop.f32.mrf.mxu0
  %v90 = vadd.f32 %v36, %v89
  %91 = vmatmul.f32.gmra.mxu0 %v52
  %v92 = vpop.f32.mrf.mxu0
  %v93 = vadd.f32 %v36, %v92
  %94 = vmatmul.f32.gmra.mxu0 %v55
  %v95 = vpop.f32.mrf.mxu0
  %v96 = vadd.f32 %v36, %v95
  %97 = vmatmul.f32.gmra.mxu0 %v58
  %v98 = vpop.f32.mrf.mxu0
  %v99 = vadd.f32 %v36, %v98
  %100 = vmatmul.f32.gmra.mxu0 %v61
  %v101 = vpop.f32.mrf.mxu0
  %v102 = vadd.f32 %v36, %v101
  %103 = vdwg.mxu0
  %104 = vst [vmem:[%s4] sm:$0xff] %v81
  %105 = vst [vmem:[%s4 + $0x8] sm:$0xff] %v84
  %106 = vst [vmem:[%s4 + $0x10] sm:$0xff] %v87
  %107 = vst [vmem:[%s4 + $0x18] sm:$0xff] %v90
  %108 = vst [vmem:[%s4 + $0x20] sm:$0xff] %v93
  %109 = vst [vmem:[%s4 + $0x28] sm:$0xff] %v96
  %110 = vst [vmem:[%s4 + $0x30] sm:$0xff] %v99
  %111 = vst [vmem:[%s4 + $0x38] sm:$0xff] %v102
  %v112 = vld [vmem:[%s3] sm:$0xff]
  %v113 = vld [vmem:[%s3 + $0x8] sm:$0xff]
  %v114 = vld [vmem:[%s3 + $0x10] sm:$0xff]
  %v115 = vld [vmem:[%s3 + $0x18] sm:$0xff]
  %v116 = vld [vmem:[%s3 + $0x20] sm:$0xff]
  %v117 = vld [vmem:[%s3 + $0x28] sm:$0xff]
  %v118 = vld [vmem:[%s3 + $0x30] sm:$0xff]
  %v119 = vld [vmem:[%s3 + $0x38] sm:$0xff]
  %v120 = vld [vmem:[%s3 + $0x40] sm:$0xff]
  %v121 = vld [vmem:[%s3 + $0x48] sm:$0xff]
  %v122 = vld [vmem:[%s3 + $0x50] sm:$0xff]
  %v123 = vld [vmem:[%s3 + $0x58] sm:$0xff]
  %v124 = vld [vmem:[%s3 + $0x60] sm:$0xff]
  %v125 = vld [vmem:[%s3 + $0x68] sm:$0xff]
  %v126 = vld [vmem:[%s3 + $0x70] sm:$0xff]
  %v127 = vld [vmem:[%s3 + $0x78] sm:$0xff]
  %v128 = vld [vmem:[#allocation2] sm:$0xff]
  %v129 = vld [vmem:[%s4] sm:$0xff]
  %130 = vmatpush.msra.mxu0 %v127
  %131 = vmatpush.msra.mxu0 %v126
  %132 = vmatpush.msra.mxu0 %v125
  %133 = vmatpush.msra.mxu0 %v124
  %134 = vmatpush.msra.mxu0 %v123
  %135 = vmatpush.msra.mxu0 %v122
  %136 = vmatpush.msra.mxu0 %v121
  %137 = vmatpush.msra.mxu0 %v120
  %138 = vmatpush.msra.mxu0 %v119
  %139 = vmatpush.msra.mxu0 %v118
  %140 = vmatpush.msra.mxu0 %v117
  %141 = vmatpush.msra.mxu0 %v116
  %142 = vmatpush.msra.mxu0 %v115
  %143 = vmatpush.msra.mxu0 %v114
  %144 = vmatpush.msra.mxu0 %v113
  %145 = vmatpush.msra.mxu0 %v112
  %146 = vmatmul.f32.gmra.mxu0 %v128
  %v147 = vpop.f32.mrf.mxu0
  %v148 = vadd.f32 0.0, %v147
  %149 = vdwg.mxu0
  %v150 = vadd.f32 %v129, %v148
  %v151 = vtanh.pop %v150
  %152 = vst [vmem:[%s4] sm:$0xff] %v151
  %s153 = scalar_lea.vmem %s4, 8
  %v154 = vld [vmem:[%s153] sm:$0xff]
  %155 = vmatpush.msra.mxu0 %v127
  %156 = vmatpush.msra.mxu0 %v126
  %157 = vmatpush.msra.mxu0 %v125
  %158 = vmatpush.msra.mxu0 %v124
  %159 = vmatpush.msra.mxu0 %v123
  %160 = vmatpush.msra.mxu0 %v122
  %161 = vmatpush.msra.mxu0 %v121
  %162 = vmatpush.msra.mxu0 %v120
  %163 = vmatpush.msra.mxu0 %v119
  %164 = vmatpush.msra.mxu0 %v118
  %165 = vmatpush.msra.mxu0 %v117
  %166 = vmatpush.msra.mxu0 %v116
  %167 = vmatpush.msra.mxu0 %v115
  %168 = vmatpush.msra.mxu0 %v114
  %169 = vmatpush.msra.mxu0 %v113
  %170 = vmatpush.msra.mxu0 %v112
  %171 = vmatmul.f32.gmra.mxu0 %v151
  %v172 = vpop.f32.mrf.mxu0
  %v173 = vadd.f32 0.0, %v172
  %174 = vdwg.mxu0
  %v175 = vadd.f32 %v154, %v173
  %v176 = vtanh.pop %v175
  %177 = vst [vmem:[%s153] sm:$0xff] %v176
  %s178 = scalar_lea.vmem %s4, 16
  %v179 = vld [vmem:[%s178] sm:$0xff]
  %180 = vmatpush.msra.mxu0 %v127
  %181 = vmatpush.msra.mxu0 %v126
  %182 = vmatpush.msra.mxu0 %v125
  %183 = vmatpush.msra.mxu0 %v124
  %184 = vmatpush.msra.mxu0 %v123
  %185 = vmatpush.msra.mxu0 %v122
  %186 = vmatpush.msra.mxu0 %v121
  %187 = vmatpush.msra.mxu0 %v120
  %188 = vmatpush.msra.mxu0 %v119
  %189 = vmatpush.msra.mxu0 %v118
  %190 = vmatpush.msra.mxu0 %v117
  %191 = vmatpush.msra.mxu0 %v116
  %192 = vmatpush.msra.mxu0 %v115
  %193 = vmatpush.msra.mxu0 %v114
  %194 = vmatpush.msra.mxu0 %v113
  %195 = vmatpush.msra.mxu0 %v112
  %196 = vmatmul.f32.gmra.mxu0 %v176
  %v197 = vpop.f32.mrf.mxu0
  %v198 = vadd.f32 0.0, %v197
  %199 = vdwg.mxu0
  %v200 = vadd.f32 %v179, %v198
  %v201 = vtanh.pop %v200
  %202 = vst [vmem:[%s178] sm:$0xff] %v201
  %s203 = scalar_lea.vmem %s4, 24
  %v204 = vld [vmem:[%s203] sm:$0xff]
  %205 = vmatpush.msra.mxu0 %v127
  %206 = vmatpush.msra.mxu0 %v126
  %207 = vmatpush.msra.mxu0 %v125
  %208 = vmatpush.msra.mxu0 %v124
  %209 = vmatpush.msra.mxu0 %v123
  %210 = vmatpush.msra.mxu0 %v122
  %211 = vmatpush.msra.mxu0 %v121
  %212 = vmatpush.msra.mxu0 %v120
  %213 = vmatpush.msra.mxu0 %v119
  %214 = vmatpush.msra.mxu0 %v118
  %215 = vmatpush.msra.mxu0 %v117
  %216 = vmatpush.msra.mxu0 %v116
  %217 = vmatpush.msra.mxu0 %v115
  %218 = vmatpush.msra.mxu0 %v114
  %219 = vmatpush.msra.mxu0 %v113
  %220 = vmatpush.msra.mxu0 %v112
  %221 = vmatmul.f32.gmra.mxu0 %v201
  %v222 = vpop.f32.mrf.mxu0
  %v223 = vadd.f32 0.0, %v222
  %224 = vdwg.mxu0
  %v225 = vadd.f32 %v204, %v223
  %v226 = vtanh.pop %v225
  %227 = vst [vmem:[%s203] sm:$0xff] %v226
  %s228 = scalar_lea.vmem %s4, 32
  %v229 = vld [vmem:[%s228] sm:$0xff]
  %230 = vmatpush.msra.mxu0 %v127
  %231 = vmatpush.msra.mxu0 %v126
  %232 = vmatpush.msra.mxu0 %v125
  %233 = vmatpush.msra.mxu0 %v124
  %234 = vmatpush.msra.mxu0 %v123
  %235 = vmatpush.msra.mxu0 %v122
  %236 = vmatpush.msra.mxu0 %v121
  %237 = vmatpush.msra.mxu0 %v120
  %238 = vmatpush.msra.mxu0 %v119
  %239 = vmatpush.msra.mxu0 %v118
  %240 = vmatpush.msra.mxu0 %v117
  %241 = vmatpush.msra.mxu0 %v116
  %242 = vmatpush.msra.mxu0 %v115
  %243 = vmatpush.msra.mxu0 %v114
  %244 = vmatpush.msra.mxu0 %v113
  %245 = vmatpush.msra.mxu0 %v112
  %246 = vmatmul.f32.gmra.mxu0 %v226
  %v247 = vpop.f32.mrf.mxu0
  %v248 = vadd.f32 0.0, %v247
  %249 = vdwg.mxu0
  %v250 = vadd.f32 %v229, %v248
  %v251 = vtanh.pop %v250
  %252 = vst [vmem:[%s228] sm:$0xff] %v251
  %s253 = scalar_lea.vmem %s4, 40
  %v254 = vld [vmem:[%s253] sm:$0xff]
  %255 = vmatpush.msra.mxu0 %v127
  %256 = vmatpush.msra.mxu0 %v126
  %257 = vmatpush.msra.mxu0 %v125
  %258 = vmatpush.msra.mxu0 %v124
  %259 = vmatpush.msra.mxu0 %v123
  %260 = vmatpush.msra.mxu0 %v122
  %261 = vmatpush.msra.mxu0 %v121
  %262 = vmatpush.msra.mxu0 %v120
  %263 = vmatpush.msra.mxu0 %v119
  %264 = vmatpush.msra.mxu0 %v118
  %265 = vmatpush.msra.mxu0 %v117
  %266 = vmatpush.msra.mxu0 %v116
  %267 = vmatpush.msra.mxu0 %v115
  %268 = vmatpush.msra.mxu0 %v114
  %269 = vmatpush.msra.mxu0 %v113
  %270 = vmatpush.msra.mxu0 %v112
  %271 = vmatmul.f32.gmra.mxu0 %v251
  %v272 = vpop.f32.mrf.mxu0
  %v273 = vadd.f32 0.0, %v272
  %274 = vdwg.mxu0
  %v275 = vadd.f32 %v254, %v273
  %v276 = vtanh.pop %v275
  %277 = vst [vmem:[%s253] sm:$0xff] %v276
  %s278 = scalar_lea.vmem %s4, 48
  %v279 = vld [vmem:[%s278] sm:$0xff]
  %280 = vmatpush.msra.mxu0 %v127
  %281 = vmatpush.msra.mxu0 %v126
  %282 = vmatpush.msra.mxu0 %v125
  %283 = vmatpush.msra.mxu0 %v124
  %284 = vmatpush.msra.mxu0 %v123
  %285 = vmatpush.msra.mxu0 %v122
  %286 = vmatpush.msra.mxu0 %v121
  %287 = vmatpush.msra.mxu0 %v120
  %288 = vmatpush.msra.mxu0 %v119
  %289 = vmatpush.msra.mxu0 %v118
  %290 = vmatpush.msra.mxu0 %v117
  %291 = vmatpush.msra.mxu0 %v116
  %292 = vmatpush.msra.mxu0 %v115
  %293 = vmatpush.msra.mxu0 %v114
  %294 = vmatpush.msra.mxu0 %v113
  %295 = vmatpush.msra.mxu0 %v112
  %296 = vmatmul.f32.gmra.mxu0 %v276
  %v297 = vpop.f32.mrf.mxu0
  %v298 = vadd.f32 0.0, %v297
  %299 = vdwg.mxu0
  %v300 = vadd.f32 %v279, %v298
  %v301 = vtanh.pop %v300
  %302 = vst [vmem:[%s278] sm:$0xff] %v301
  %s303 = scalar_lea.vmem %s4, 56
  %v304 = vld [vmem:[%s303] sm:$0xff]
  %305 = vmatpush.msra.mxu0 %v127
  %306 = vmatpush.msra.mxu0 %v126
  %307 = vmatpush.msra.mxu0 %v125
  %308 = vmatpush.msra.mxu0 %v124
  %309 = vmatpush.msra.mxu0 %v123
  %310 = vmatpush.msra.mxu0 %v122
  %311 = vmatpush.msra.mxu0 %v121
  %312 = vmatpush.msra.mxu0 %v120
  %313 = vmatpush.msra.mxu0 %v119
  %314 = vmatpush.msra.mxu0 %v118
  %315 = vmatpush.msra.mxu0 %v117
  %316 = vmatpush.msra.mxu0 %v116
  %317 = vmatpush.msra.mxu0 %v115
  %318 = vmatpush.msra.mxu0 %v114
  %319 = vmatpush.msra.mxu0 %v113
  %320 = vmatpush.msra.mxu0 %v112
  %321 = vmatmul.f32.gmra.mxu0 %v301
  %v322 = vpop.f32.mrf.mxu0
  %v323 = vadd.f32 0.0, %v322
  %324 = vdwg.mxu0
  %v325 = vadd.f32 %v304, %v323
  %v326 = vtanh.pop %v325
  %327 = vst [vmem:[%s303] sm:$0xff] %v326
  %328 = vst [vmem:[#allocation2] sm:$0xff] %v326
  %329 = vst [vmem:[%s5] sm:$0xff] %v326
  // Predicated region
  $region22: #{recurrent_net_forward.1} parent=0 // pred_check
    _
  $region23: #{recurrent_net_forward.1} parent=0 // pred_check_branch
    %331 = sbr.rel (0) target = $region25
  $region24: #{recurrent_net_forward.1} parent=0 // pred_region
    _
  $region25: #{recurrent_net_forward.1} parent=0 // pred_fallthru
    _
  // Predicated region
  $region26: #{recurrent_net_forward.1} parent=0 // pred_check
    _
  $region27: #{recurrent_net_forward.1} parent=0 // pred_check_branch
    %333 = sbr.rel (0) target = $region29
  $region28: #{recurrent_net_forward.1} parent=0 // pred_region
    _
  $region29: #{recurrent_net_forward.1} parent=0 // pred_fallthru
    _
  // Predicated region
  $region30: #{recurrent_net_forward.1} parent=0 // pred_check
    _
  $region31: #{recurrent_net_forward.1} parent=0 // pred_check_branch
    %335 = sbr.rel (0) target = $region33
  $region32: #{recurrent_net_forward.1} parent=0 // pred_region
    _
  $region33: #{recurrent_net_forward.1} parent=0 // pred_fallthru
    _
  // Predicated region
  $region34: #{recurrent_net_forward.1} parent=0 // pred_check
    _
  $region35: #{recurrent_net_forward.1} parent=0 // pred_check_branch
    %337 = sbr.rel (0) target = $region37
  $region36: #{recurrent_net_forward.1} parent=0 // pred_region
    _
  $region37: #{recurrent_net_forward.1} parent=0 // pred_fallthru
    _

// kernel: recurrent_net_forward.1
$region0: #{recurrent_net_forward.1}
  #allocation0 [shape = 'u32[]', space=smem, size = 0x4, offset = 0x4, fixed_abs, tag = 'smem constant byte address 0x4 - core index']
  #allocation1 [shape = 'u32[72,128]{1,0:T(1,128)}', space=vmem, size = 0x9000, scoped, tag = 'internal scratch']
  #allocation2 [shape = 'f32[8,128]{1,0:T(8,128)}', space=vmem, size = 0x1000, scoped, tag = 'scratch operand']
  %s0 = inlined_call_operand.vmem [shape: f32[8,8,16], index: 0, kind: input, shape index: {}]
  %s1 = inlined_call_operand.vmem [shape: f32[16,128], index: 1, kind: input, shape index: {}]
  %s2 = inlined_call_operand.vmem [shape: f32[1,128], index: 2, kind: input, shape index: {}]
  %s3 = inlined_call_operand.vmem [shape: f32[128,128], index: 3, kind: input, shape index: {}]
  %s4 = inlined_call_operand.vmem [shape: f32[8,8,128], index: 4, kind: output, shape index: {0}]
  %s5 = inlined_call_operand.vmem [shape: f32[8,128], index: 5, kind: output, shape index: {1}]
  %6 = xla_tuple %s4, %s5
  %s7 = sld [smem:[#allocation0]]
  $region38: #{recurrent_net_forward.1} parent=0
    _
  %s9 = ssub.s32 1, %s7
  %s10 = scalar_select 0, %s9, %s7
  // Predicated region
  $region2: #{recurrent_net_forward.1} parent=0 // pred_check
    _
  $region3: #{recurrent_net_forward.1} parent=0 // pred_check_branch
    %12 = sbr.rel (0) target = $region5
  $region4: #{recurrent_net_forward.1} parent=0 // pred_region
    _
  $region5: #{recurrent_net_forward.1} parent=0 // pred_fallthru
    _
  // Predicated region
  $region6: #{recurrent_net_forward.1} parent=0 // pred_check
    _
  $region7: #{recurrent_net_forward.1} parent=0 // pred_check_branch
    %14 = sbr.rel (0) target = $region9
  $region8: #{recurrent_net_forward.1} parent=0 // pred_region
    _
  $region9: #{recurrent_net_forward.1} parent=0 // pred_fallthru
    _
  // Predicated region
  $region10: #{recurrent_net_forward.1} parent=0 // pred_check
    _
  $region11: #{recurrent_net_forward.1} parent=0 // pred_check_branch
    %16 = sbr.rel (0) target = $region13
  $region12: #{recurrent_net_forward.1} parent=0 // pred_region
    _
  $region13: #{recurrent_net_forward.1} parent=0 // pred_fallthru
    _
  // Predicated region
  $region14: #{recurrent_net_forward.1} parent=0 // pred_check
    _
  $region15: #{recurrent_net_forward.1} parent=0 // pred_check_branch
    %18 = sbr.rel (0) target = $region17
  $region16: #{recurrent_net_forward.1} parent=0 // pred_region
    _
  $region17: #{recurrent_net_forward.1} parent=0 // pred_fallthru
    _
  %p19 = scmp.eq.s32.totalorder 0, 0
  // Predicated region
  $region18: #{recurrent_net_forward.1} parent=0 // pred_check
    %p20 = pneg %p19
  $region19: #{recurrent_net_forward.1} parent=0 // pred_check_branch
    %22 = sbr.rel (%p20) target = $region21
  $region20: #{recurrent_net_forward.1} parent=0 // pred_region
    %23 = vst [vmem:[#allocation2] sm:$0xff] 0.0
  $region21: #{recurrent_net_forward.1} parent=0 // pred_fallthru
    _
  %v24 = vld [vmem:[%s0] sm:$0xff]
  %v25 = vld [vmem:[%s0 + $0x8] sm:$0xff]
  %v26 = vld [vmem:[%s0 + $0x10] sm:$0xff]
  %v27 = vld [vmem:[%s0 + $0x18] sm:$0xff]
  %v28 = vld [vmem:[%s0 + $0x20] sm:$0xff]
  %v29 = vld [vmem:[%s0 + $0x28] sm:$0xff]
  %v30 = vld [vmem:[%s0 + $0x30] sm:$0xff]
  %v31 = vld [vmem:[%s0 + $0x38] sm:$0xff]
  %v32 = vld [vmem:[%s1] sm:$0xff]
  %v33 = vld [vmem:[%s1 + $0x8] sm:$0xff]
  %v34 = vld [vmem:[%s2] sm:$0x1]
  %v36 = vperm.slane %v34, 0
  %vm38 = vcmask 130048
  %v40 = vsel %vm38, %v24, 0
  %v43 = vsel %vm38, %v25, 0
  %v46 = vsel %vm38, %v26, 0
  %v49 = vsel %vm38, %v27, 0
  %v52 = vsel %vm38, %v28, 0
  %v55 = vsel %vm38, %v29, 0
  %v58 = vsel %vm38, %v30, 0
  %v61 = vsel %vm38, %v31, 0
  %63 = vmatpush.msra.mxu0 0.0
  %64 = vmatpush.msra.mxu0 0.0
  %65 = vmatpush.msra.mxu0 0.0
  %66 = vmatpush.msra.mxu0 0.0
  %67 = vmatpush.msra.mxu0 0.0
  %68 = vmatpush.msra.mxu0 0.0
  %69 = vmatpush.msra.mxu0 0.0
  %70 = vmatpush.msra.mxu0 0.0
  %71 = vmatpush.msra.mxu0 0.0
  %72 = vmatpush.msra.mxu0 0.0
  %73 = vmatpush.msra.mxu0 0.0
  %74 = vmatpush.msra.mxu0 0.0
  %75 = vmatpush.msra.mxu0 0.0
  %76 = vmatpush.msra.mxu0 0.0
  %77 = vmatpush.msra.mxu0 %v33
  %78 = vmatpush.msra.mxu0 %v32
  %79 = vmatmul.f32.gmra.mxu0 %v40
  %v80 = vpop.f32.mrf.mxu0
  %v81 = vadd.f32 %v36, %v80
  %82 = vmatmul.f32.gmra.mxu0 %v43
  %v83 = vpop.f32.mrf.mxu0
  %v84 = vadd.f32 %v36, %v83
  %85 = vmatmul.f32.gmra.mxu0 %v46
  %v86 = vpop.f32.mrf.mxu0
  %v87 = vadd.f32 %v36, %v86
  %88 = vmatmul.f32.gmra.mxu0 %v49
  %v89 = vpop.f32.mrf.mxu0
  %v90 = vadd.f32 %v36, %v89
  %91 = vmatmul.f32.gmra.mxu0 %v52
  %v92 = vpop.f32.mrf.mxu0
  %v93 = vadd.f32 %v36, %v92
  %94 = vmatmul.f32.gmra.mxu0 %v55
  %v95 = vpop.f32.mrf.mxu0
  %v96 = vadd.f32 %v36, %v95
  %97 = vmatmul.f32.gmra.mxu0 %v58
  %v98 = vpop.f32.mrf.mxu0
  %v99 = vadd.f32 %v36, %v98
  %100 = vmatmul.f32.gmra.mxu0 %v61
  %v101 = vpop.f32.mrf.mxu0
  %v102 = vadd.f32 %v36, %v101
  %103 = vdwg.mxu0
  %104 = vst [vmem:[%s4] sm:$0xff] %v81
  %105 = vst [vmem:[%s4 + $0x8] sm:$0xff] %v84
  %106 = vst [vmem:[%s4 + $0x10] sm:$0xff] %v87
  %107 = vst [vmem:[%s4 + $0x18] sm:$0xff] %v90
  %108 = vst [vmem:[%s4 + $0x20] sm:$0xff] %v93
  %109 = vst [vmem:[%s4 + $0x28] sm:$0xff] %v96
  %110 = vst [vmem:[%s4 + $0x30] sm:$0xff] %v99
  %111 = vst [vmem:[%s4 + $0x38] sm:$0xff] %v102
  %v112 = vld [vmem:[%s3] sm:$0xff]
  %v113 = vld [vmem:[%s3 + $0x8] sm:$0xff]
  %v114 = vld [vmem:[%s3 + $0x10] sm:$0xff]
  %v115 = vld [vmem:[%s3 + $0x18] sm:$0xff]
  %v116 = vld [vmem:[%s3 + $0x20] sm:$0xff]
  %v117 = vld [vmem:[%s3 + $0x28] sm:$0xff]
  %v118 = vld [vmem:[%s3 + $0x30] sm:$0xff]
  %v119 = vld [vmem:[%s3 + $0x38] sm:$0xff]
  %v120 = vld [vmem:[%s3 + $0x40] sm:$0xff]
  %v121 = vld [vmem:[%s3 + $0x48] sm:$0xff]
  %v122 = vld [vmem:[%s3 + $0x50] sm:$0xff]
  %v123 = vld [vmem:[%s3 + $0x58] sm:$0xff]
  %v124 = vld [vmem:[%s3 + $0x60] sm:$0xff]
  %v125 = vld [vmem:[%s3 + $0x68] sm:$0xff]
  %v126 = vld [vmem:[%s3 + $0x70] sm:$0xff]
  %v127 = vld [vmem:[%s3 + $0x78] sm:$0xff]
  %v128 = vld [vmem:[#allocation2] sm:$0xff]
  %v129 = vld [vmem:[%s4] sm:$0xff]
  %130 = vmatpush.msra.mxu0 %v127
  %131 = vmatpush.msra.mxu0 %v126
  %132 = vmatpush.msra.mxu0 %v125
  %133 = vmatpush.msra.mxu0 %v124
  %134 = vmatpush.msra.mxu0 %v123
  %135 = vmatpush.msra.mxu0 %v122
  %136 = vmatpush.msra.mxu0 %v121
  %137 = vmatpush.msra.mxu0 %v120
  %138 = vmatpush.msra.mxu0 %v119
  %139 = vmatpush.msra.mxu0 %v118
  %140 = vmatpush.msra.mxu0 %v117
  %141 = vmatpush.msra.mxu0 %v116
  %142 = vmatpush.msra.mxu0 %v115
  %143 = vmatpush.msra.mxu0 %v114
  %144 = vmatpush.msra.mxu0 %v113
  %145 = vmatpush.msra.mxu0 %v112
  %146 = vmatmul.f32.gmra.mxu0 %v128
  %v147 = vpop.f32.mrf.mxu0
  %v148 = vadd.f32 0.0, %v147
  %149 = vdwg.mxu0
  %v150 = vadd.f32 %v129, %v148
  %v151 = vtanh.pop %v150
  %152 = vst [vmem:[%s4] sm:$0xff] %v151
  %s153 = scalar_lea.vmem %s4, 8
  %v154 = vld [vmem:[%s153] sm:$0xff]
  %155 = vmatpush.msra.mxu0 %v127
  %156 = vmatpush.msra.mxu0 %v126
  %157 = vmatpush.msra.mxu0 %v125
  %158 = vmatpush.msra.mxu0 %v124
  %159 = vmatpush.msra.mxu0 %v123
  %160 = vmatpush.msra.mxu0 %v122
  %161 = vmatpush.msra.mxu0 %v121
  %162 = vmatpush.msra.mxu0 %v120
  %163 = vmatpush.msra.mxu0 %v119
  %164 = vmatpush.msra.mxu0 %v118
  %165 = vmatpush.msra.mxu0 %v117
  %166 = vmatpush.msra.mxu0 %v116
  %167 = vmatpush.msra.mxu0 %v115
  %168 = vmatpush.msra.mxu0 %v114
  %169 = vmatpush.msra.mxu0 %v113
  %170 = vmatpush.msra.mxu0 %v112
  %171 = vmatmul.f32.gmra.mxu0 %v151
  %v172 = vpop.f32.mrf.mxu0
  %v173 = vadd.f32 0.0, %v172
  %174 = vdwg.mxu0
  %v175 = vadd.f32 %v154, %v173
  %v176 = vtanh.pop %v175
  %177 = vst [vmem:[%s153] sm:$0xff] %v176
  %s178 = scalar_lea.vmem %s4, 16
  %v179 = vld [vmem:[%s178] sm:$0xff]
  %180 = vmatpush.msra.mxu0 %v127
  %181 = vmatpush.msra.mxu0 %v126
  %182 = vmatpush.msra.mxu0 %v125
  %183 = vmatpush.msra.mxu0 %v124
  %184 = vmatpush.msra.mxu0 %v123
  %185 = vmatpush.msra.mxu0 %v122
  %186 = vmatpush.msra.mxu0 %v121
  %187 = vmatpush.msra.mxu0 %v120
  %188 = vmatpush.msra.mxu0 %v119
  %189 = vmatpush.msra.mxu0 %v118
  %190 = vmatpush.msra.mxu0 %v117
  %191 = vmatpush.msra.mxu0 %v116
  %192 = vmatpush.msra.mxu0 %v115
  %193 = vmatpush.msra.mxu0 %v114
  %194 = vmatpush.msra.mxu0 %v113
  %195 = vmatpush.msra.mxu0 %v112
  %196 = vmatmul.f32.gmra.mxu0 %v176
  %v197 = vpop.f32.mrf.mxu0
  %v198 = vadd.f32 0.0, %v197
  %199 = vdwg.mxu0
  %v200 = vadd.f32 %v179, %v198
  %v201 = vtanh.pop %v200
  %202 = vst [vmem:[%s178] sm:$0xff] %v201
  %s203 = scalar_lea.vmem %s4, 24
  %v204 = vld [vmem:[%s203] sm:$0xff]
  %205 = vmatpush.msra.mxu0 %v127
  %206 = vmatpush.msra.mxu0 %v126
  %207 = vmatpush.msra.mxu0 %v125
  %208 = vmatpush.msra.mxu0 %v124
  %209 = vmatpush.msra.mxu0 %v123
  %210 = vmatpush.msra.mxu0 %v122
  %211 = vmatpush.msra.mxu0 %v121
  %212 = vmatpush.msra.mxu0 %v120
  %213 = vmatpush.msra.mxu0 %v119
  %214 = vmatpush.msra.mxu0 %v118
  %215 = vmatpush.msra.mxu0 %v117
  %216 = vmatpush.msra.mxu0 %v116
  %217 = vmatpush.msra.mxu0 %v115
  %218 = vmatpush.msra.mxu0 %v114
  %219 = vmatpush.msra.mxu0 %v113
  %220 = vmatpush.msra.mxu0 %v112
  %221 = vmatmul.f32.gmra.mxu0 %v201
  %v222 = vpop.f32.mrf.mxu0
  %v223 = vadd.f32 0.0, %v222
  %224 = vdwg.mxu0
  %v225 = vadd.f32 %v204, %v223
  %v226 = vtanh.pop %v225
  %227 = vst [vmem:[%s203] sm:$0xff] %v226
  %s228 = scalar_lea.vmem %s4, 32
  %v229 = vld [vmem:[%s228] sm:$0xff]
  %230 = vmatpush.msra.mxu0 %v127
  %231 = vmatpush.msra.mxu0 %v126
  %232 = vmatpush.msra.mxu0 %v125
  %233 = vmatpush.msra.mxu0 %v124
  %234 = vmatpush.msra.mxu0 %v123
  %235 = vmatpush.msra.mxu0 %v122
  %236 = vmatpush.msra.mxu0 %v121
  %237 = vmatpush.msra.mxu0 %v120
  %238 = vmatpush.msra.mxu0 %v119
  %239 = vmatpush.msra.mxu0 %v118
  %240 = vmatpush.msra.mxu0 %v117
  %241 = vmatpush.msra.mxu0 %v116
  %242 = vmatpush.msra.mxu0 %v115
  %243 = vmatpush.msra.mxu0 %v114
  %244 = vmatpush.msra.mxu0 %v113
  %245 = vmatpush.msra.mxu0 %v112
  %246 = vmatmul.f32.gmra.mxu0 %v226
  %v247 = vpop.f32.mrf.mxu0
  %v248 = vadd.f32 0.0, %v247
  %249 = vdwg.mxu0
  %v250 = vadd.f32 %v229, %v248
  %v251 = vtanh.pop %v250
  %252 = vst [vmem:[%s228] sm:$0xff] %v251
  %s253 = scalar_lea.vmem %s4, 40
  %v254 = vld [vmem:[%s253] sm:$0xff]
  %255 = vmatpush.msra.mxu0 %v127
  %256 = vmatpush.msra.mxu0 %v126
  %257 = vmatpush.msra.mxu0 %v125
  %258 = vmatpush.msra.mxu0 %v124
  %259 = vmatpush.msra.mxu0 %v123
  %260 = vmatpush.msra.mxu0 %v122
  %261 = vmatpush.msra.mxu0 %v121
  %262 = vmatpush.msra.mxu0 %v120
  %263 = vmatpush.msra.mxu0 %v119
  %264 = vmatpush.msra.mxu0 %v118
  %265 = vmatpush.msra.mxu0 %v117
  %266 = vmatpush.msra.mxu0 %v116
  %267 = vmatpush.msra.mxu0 %v115
  %268 = vmatpush.msra.mxu0 %v114
  %269 = vmatpush.msra.mxu0 %v113
  %270 = vmatpush.msra.mxu0 %v112
  %271 = vmatmul.f32.gmra.mxu0 %v251
  %v272 = vpop.f32.mrf.mxu0
  %v273 = vadd.f32 0.0, %v272
  %274 = vdwg.mxu0
  %v275 = vadd.f32 %v254, %v273
  %v276 = vtanh.pop %v275
  %277 = vst [vmem:[%s253] sm:$0xff] %v276
  %s278 = scalar_lea.vmem %s4, 48
  %v279 = vld [vmem:[%s278] sm:$0xff]
  %280 = vmatpush.msra.mxu0 %v127
  %281 = vmatpush.msra.mxu0 %v126
  %282 = vmatpush.msra.mxu0 %v125
  %283 = vmatpush.msra.mxu0 %v124
  %284 = vmatpush.msra.mxu0 %v123
  %285 = vmatpush.msra.mxu0 %v122
  %286 = vmatpush.msra.mxu0 %v121
  %287 = vmatpush.msra.mxu0 %v120
  %288 = vmatpush.msra.mxu0 %v119
  %289 = vmatpush.msra.mxu0 %v118
  %290 = vmatpush.msra.mxu0 %v117
  %291 = vmatpush.msra.mxu0 %v116
  %292 = vmatpush.msra.mxu0 %v115
  %293 = vmatpush.msra.mxu0 %v114
  %294 = vmatpush.msra.mxu0 %v113
  %295 = vmatpush.msra.mxu0 %v112
  %296 = vmatmul.f32.gmra.mxu0 %v276
  %v297 = vpop.f32.mrf.mxu0
  %v298 = vadd.f32 0.0, %v297
  %299 = vdwg.mxu0
  %v300 = vadd.f32 %v279, %v298
  %v301 = vtanh.pop %v300
  %302 = vst [vmem:[%s278] sm:$0xff] %v301
  %s303 = scalar_lea.vmem %s4, 56
  %v304 = vld [vmem:[%s303] sm:$0xff]
  %305 = vmatpush.msra.mxu0 %v127
  %306 = vmatpush.msra.mxu0 %v126
  %307 = vmatpush.msra.mxu0 %v125
  %308 = vmatpush.msra.mxu0 %v124
  %309 = vmatpush.msra.mxu0 %v123
  %310 = vmatpush.msra.mxu0 %v122
  %311 = vmatpush.msra.mxu0 %v121
  %312 = vmatpush.msra.mxu0 %v120
  %313 = vmatpush.msra.mxu0 %v119
  %314 = vmatpush.msra.mxu0 %v118
  %315 = vmatpush.msra.mxu0 %v117
  %316 = vmatpush.msra.mxu0 %v116
  %317 = vmatpush.msra.mxu0 %v115
  %318 = vmatpush.msra.mxu0 %v114
  %319 = vmatpush.msra.mxu0 %v113
  %320 = vmatpush.msra.mxu0 %v112
  %321 = vmatmul.f32.gmra.mxu0 %v301
  %v322 = vpop.f32.mrf.mxu0
  %v323 = vadd.f32 0.0, %v322
  %324 = vdwg.mxu0
  %v325 = vadd.f32 %v304, %v323
  %v326 = vtanh.pop %v325
  %327 = vst [vmem:[%s303] sm:$0xff] %v326
  %328 = vst [vmem:[#allocation2] sm:$0xff] %v326
  %329 = vst [vmem:[%s5] sm:$0xff] %v326
  // Predicated region
  $region22: #{recurrent_net_forward.1} parent=0 // pred_check
    _
  $region23: #{recurrent_net_forward.1} parent=0 // pred_check_branch
    %331 = sbr.rel (0) target = $region25
  $region24: #{recurrent_net_forward.1} parent=0 // pred_region
    _
  $region25: #{recurrent_net_forward.1} parent=0 // pred_fallthru
    _
  // Predicated region
  $region26: #{recurrent_net_forward.1} parent=0 // pred_check
    _
  $region27: #{recurrent_net_forward.1} parent=0 // pred_check_branch
    %333 = sbr.rel (0) target = $region29
  $region28: #{recurrent_net_forward.1} parent=0 // pred_region
    _
  $region29: #{recurrent_net_forward.1} parent=0 // pred_fallthru
    _
  // Predicated region
  $region30: #{recurrent_net_forward.1} parent=0 // pred_check
    _
  $region31: #{recurrent_net_forward.1} parent=0 // pred_check_branch
    %335 = sbr.rel (0) target = $region33
  $region32: #{recurrent_net_forward.1} parent=0 // pred_region
    _
  $region33: #{recurrent_net_forward.1} parent=0 // pred_fallthru
    _
  // Predicated region
  $region34: #{recurrent_net_forward.1} parent=0 // pred_check
    _
  $region35: #{recurrent_net_forward.1} parent=0 // pred_check_branch
    %337 = sbr.rel (0) target = $region37
  $region36: #{recurrent_net_forward.1} parent=0 // pred_region
    _
  $region37: #{recurrent_net_forward.1} parent=0 // pred_fallthru
    _

</llo_original>
